<compile_context>
chip_gen: v6e
topology: v6e:2x2x1
jax: 0.10.0
libtpu: 0.0.40
codegen_flags: <defaults>
</compile_context>

<pallas_src>
import numpy as np
import jax
import jax.numpy as jnp
from jax import lax
from jax.experimental import pallas as pl
from jax.experimental.pallas import tpu as pltpu

HEIGHT_DIM = 4
MOTIVE_RANK = 4
NUM_PRIMES = 8
NUM_LAYERS = 3
MAX_TILE = 4096        # row-tile cap (review: 2048-8192 amortizes per-step overhead)
MET_W = 128            # metric accumulator lane width


def _round_up(v, m):
    return -(-v // m) * m


# ---------------------------------------------------------------------------
# Parameter packing (host side, plain JAX)
# ---------------------------------------------------------------------------
def pack_layer_mats(p):
    """Pack one ArithmeticDynamics layer into two matmul operands.

    WA : (d_in, 4 + d_half)  = [height_map.W | l_function[0].W]
    ba : (1, 4 + d_half)     = [bh | b1]
    WB : (4 + d_half, 12)    columns = [h_new | flow_field | l_values]
    bb : (1, 12)

    Folds: coupling einsum ('ph,bsh->bsh' == *coupling.sum(0)), the flow
    linear, the 0.1*l term and the +h residual into WB, so the kernel never
    has to slice/recombine lanes between the two matmuls.
    """
    d_half = p["w1"].shape[1]
    cs = p["coupling"].sum(axis=0, keepdims=True)                  # (1, 4)
    wf_c = p["wf"] * cs                                            # column-scaled flow
    eye = jnp.eye(HEIGHT_DIM, dtype=jnp.float32)
    zeros44 = jnp.zeros((HEIGHT_DIM, MOTIVE_RANK), jnp.float32)
    top = jnp.concatenate([eye + wf_c, wf_c, zeros44], axis=1)     # (4, 12)
    bot = jnp.concatenate([0.1 * p["w2"], 0.1 * p["w2"], p["w2"]], axis=1)
    WB = jnp.concatenate([top, bot], axis=0)                       # (4+dh, 12)
    b_flow = p["bf"] * cs + 0.1 * p["b2"]                          # (1, 4)
    bb = jnp.concatenate([b_flow, b_flow, p["b2"]], axis=1)        # (1, 12)
    WA = jnp.concatenate([p["wh"], p["w1"]], axis=1)               # (d_in, 4+dh)
    ba = jnp.concatenate([p["bh"], p["b1"]], axis=1)               # (1, 4+dh)
    return WA, ba, WB, bb


def build_weight_slab(raw_layers, wp, bp):
    """Pack every matrix/bias into one (R, W) f32 slab + static row layout."""
    named = []
    for li, p in enumerate(raw_layers):
        WA, ba, WB, bb = pack_layer_mats(p)
        named.extend([(f"wa{li}", WA, True), (f"wb{li}", WB, True),
                      (f"ba{li}", ba, False), (f"bb{li}", bb, False)])
    named.append(("wp", jnp.asarray(wp, jnp.float32), True))
    named.append(("bp", jnp.asarray(bp, jnp.float32), False))

    slab_w = _round_up(max(a.shape[1] for _, a, _ in named), 8)
    mats = [e for e in named if e[2]]      # 8-row-aligned segments first
    vecs = [e for e in named if not e[2]]  # dense bias rows at the tail

    layout, entries, rows = {}, [], 0
    for name, a, align in mats + vecs:
        layout[name] = (rows, a.shape[0], a.shape[1])
        entries.append((rows, a))
        rows += _round_up(a.shape[0], 8) if align else a.shape[0]
    total = _round_up(rows, 8)

    slab = jnp.zeros((total, slab_w), jnp.float32)
    for r0, a in entries:
        slab = slab.at[r0:r0 + a.shape[0], :a.shape[1]].set(a)
    return slab, layout


# ---------------------------------------------------------------------------
# Fused forward: 3x ArithmeticDynamics + pattern_proj + metric partial sums
# ---------------------------------------------------------------------------
def make_arithmetic_pattern_forward(layout):
    def _ld(w_ref, name):
        r0, nr, nc = layout[name]
        return w_ref[r0:r0 + nr, 0:nc]

    def forward(x, slab, couplings):
        B, S, d_in = x.shape
        n = B * S
        tile = min(MAX_TILE, _round_up(n, 8))
        grid = pl.cdiv(n, tile)
        n_pad = grid * tile
        need_mask = n_pad != n

        x2d = x.astype(jnp.float32).reshape(n, d_in)
        if need_mask:
            x2d = jnp.concatenate(
                [x2d, jnp.zeros((n_pad - n, d_in), jnp.float32)], axis=0)

        def kernel(x_ref, w_ref, out_ref, met_ref, macc_ref):
            step = pl.program_id(0)

            @pl.when(step == 0)
            def _():
                macc_ref[...] = jnp.zeros_like(macc_ref)

            if need_mask:
                ridx = step * tile + lax.broadcasted_iota(jnp.int32, (tile, 1), 0)
                validf = (ridx < n).astype(jnp.float32)
            else:
                validf = None

            cur = x_ref[...]                                   # (tile, d_in)
            contribs = []
            for li in range(NUM_LAYERS):
                wa = _ld(w_ref, f"wa{li}")
                ba = _ld(w_ref, f"ba{li}")
                wb = _ld(w_ref, f"wb{li}")
                bb = _ld(w_ref, f"bb{li}")

                # [h | pre-SiLU z] in one matmul, SiLU via lane select
                ab = jnp.dot(cur, wa, preferred_element_type=jnp.float32) + ba
                lane = lax.broadcasted_iota(jnp.int32, ab.shape, 1)
                hz = jnp.where(lane < HEIGHT_DIM, ab, ab * jax.nn.sigmoid(ab))

                # [h_new | flow_field | l_values] in one matmul
                res = jnp.dot(hz, wb, preferred_element_type=jnp.float32) + bb

                # sublane-only partial sums (lane reduction finished on host
                # side of the call, in the jitted wrapper)
                masked = res if validf is None else res * validf
                s1 = jnp.sum(masked, axis=0, keepdims=True)            # (1,12)
                s2 = jnp.sum(masked * res, axis=0, keepdims=True)      # (1,12)
                contribs.append(
                    jnp.concatenate([s1[:, :HEIGHT_DIM], s2], axis=1))  # (1,16)

                cur = res[:, :HEIGHT_DIM]                              # h_new

            mrow = jnp.concatenate(contribs, axis=1)                   # (1,48)
            pad = jnp.zeros((1, MET_W - mrow.shape[1]), jnp.float32)
            macc_ref[...] += jnp.concatenate([mrow, pad], axis=1)

            # pattern_proj on the final height coords (narrow, full-extent out)
            wp_m = _ld(w_ref, "wp")
            bp_v = _ld(w_ref, "bp")
            out_ref[...] = (jnp.dot(cur, wp_m, preferred_element_type=jnp.float32)
                            + bp_v)

            @pl.when(step == pl.num_programs(0) - 1)
            def _():
                met_ref[...] = macc_ref[...]

        # advisory cost estimate
        w1_0 = HEIGHT_DIM + d_in // 2
        w1_h = HEIGHT_DIM + HEIGHT_DIM // 2
        flops = 2 * n_pad * (d_in * w1_0 + w1_0 * 12)
        flops += 2 * (NUM_LAYERS - 1) * n_pad * (HEIGHT_DIM * w1_h + w1_h * 12)
        flops += 2 * n_pad * HEIGHT_DIM * HEIGHT_DIM
        transc = n_pad * (w1_0 + (NUM_LAYERS - 1) * w1_h)
        bytes_acc = 4 * (n_pad * d_in + n_pad * HEIGHT_DIM + slab.size + MET_W)

        out2d, met = pl.pallas_call(
            kernel,
            grid=(grid,),
            out_shape=(jax.ShapeDtypeStruct((n_pad, HEIGHT_DIM), jnp.float32),
                       jax.ShapeDtypeStruct((1, MET_W), jnp.float32)),
            in_specs=[pl.BlockSpec((tile, d_in), lambda i: (i, 0)),
                      pl.BlockSpec(slab.shape, lambda i: (0, 0))],
            out_specs=(pl.BlockSpec((tile, HEIGHT_DIM), lambda i: (i, 0)),
                       pl.BlockSpec((1, MET_W), lambda i: (0, 0))),
            scratch_shapes=[pltpu.VMEM((1, MET_W), jnp.float32)],
            compiler_params=pltpu.CompilerParams(
                # grid axis carries the metric accumulator -> sequential
                # ("arbitrary"); keeps the scratch accumulation race-free on
                # v7x megacore.  The kernel is HBM-bound, so the lost
                # megacore sharding is minor.
                dimension_semantics=("arbitrary",),
                vmem_limit_bytes=32 * 1024 * 1024),
            cost_estimate=pl.CostEstimate(flops=flops,
                                          transcendentals=transc,
                                          bytes_accessed=bytes_acc),
        )(x2d, slab)

        output = out2d[:n].reshape(B, S, HEIGHT_DIM)

        # Finish metric math on device; one tiny (3,7) array crosses to host.
        totals = met[0, :NUM_LAYERS * 16].reshape(NUM_LAYERS, 4, HEIGHT_DIM)
        totals = totals.sum(axis=-1)                           # (3, 4)
        s_h, ss_h, ss_f, ss_l = (totals[:, 0], totals[:, 1],
                                 totals[:, 2], totals[:, 3])
        cnt = float(n * HEIGHT_DIM)
        height_norm = jnp.sqrt(ss_h)                           # == layer_norm
        layer_mean = s_h / cnt
        layer_var = jnp.maximum(ss_h - s_h * s_h / cnt, 0.0) / (cnt - 1.0)
        layer_std = jnp.sqrt(layer_var)                        # torch unbiased std
        flow_norm = jnp.sqrt(ss_f)
        l_norm = jnp.sqrt(ss_l)
        coup_norm = jnp.sqrt(jnp.stack([jnp.sum(c * c) for c in couplings]))
        metrics = jnp.stack([height_norm, layer_mean, layer_std, height_norm,
                             flow_norm, l_norm, coup_norm], axis=1)
        return output, metrics

    return jax.jit(forward)


# ---------------------------------------------------------------------------
# Deterministic parameter init (synthetic; shapes match the nn.Module)
# ---------------------------------------------------------------------------
def init_layer_params(key, d_in):
    ks = jax.random.split(key, 9)
    f = jnp.float32
    d_half = d_in // 2
    return {
        "coupling": (jax.random.normal(ks[0], (NUM_PRIMES, HEIGHT_DIM), f)
                     / jnp.sqrt(float(NUM_PRIMES * HEIGHT_DIM))),
        "wh": jax.random.normal(ks[1], (d_in, HEIGHT_DIM), f) / jnp.sqrt(float(d_in)),
        "bh": 0.01 * jax.random.normal(ks[2], (1, HEIGHT_DIM), f),
        "wf": jax.random.normal(ks[3], (HEIGHT_DIM, HEIGHT_DIM), f) / jnp.sqrt(float(HEIGHT_DIM)),
        "bf": 0.01 * jax.random.normal(ks[4], (1, HEIGHT_DIM), f),
        "w1": jax.random.normal(ks[5], (d_in, d_half), f) / jnp.sqrt(float(d_in)),
        "b1": 0.01 * jax.random.normal(ks[6], (1, d_half), f),
        "w2": jax.random.normal(ks[7], (d_half, MOTIVE_RANK), f) / jnp.sqrt(float(d_half)),
        "b2": 0.01 * jax.random.normal(ks[8], (1, MOTIVE_RANK), f),
    }


if __name__ == "__main__":
    key = jax.random.PRNGKey(0)
    k_x, k_p, k_pp = jax.random.split(key, 3)

    # ArithmeticPattern(input_dim=32, hidden_dim=4, motive_rank=4, num_layers=3)
    input_dim, hidden_dim = 32, 4
    B, S = 2, 8

    x = jax.random.normal(k_x, (B, S, input_dim), jnp.float32)

    layer_keys = jax.random.split(k_p, NUM_LAYERS)
    raw_layers = [init_layer_params(layer_keys[i],
                                    input_dim if i == 0 else hidden_dim)
                  for i in range(NUM_LAYERS)]
    couplings = tuple(p["coupling"] for p in raw_layers)

    kp1, kp2 = jax.random.split(k_pp)
    wp = (jax.random.normal(kp1, (hidden_dim, hidden_dim), jnp.float32)
          / jnp.sqrt(float(hidden_dim)))
    bp = 0.01 * jax.random.normal(kp2, (1, hidden_dim), jnp.float32)

    slab, layout = build_weight_slab(raw_layers, wp, bp)
    fwd = make_arithmetic_pattern_forward(layout)

    out, met = fwd(x, slab, couplings)
    jax.block_until_ready((out, met))

    # Single device->host transfer for all 21 metric scalars.
    met_np = np.asarray(met)
    names = ("layer_norm", "layer_mean", "layer_std", "height_norm",
             "flow_norm", "l_values_norm", "coupling_norm")
    metrics = [{k: float(v) for k, v in zip(names, row)} for row in met_np]

    assert out.shape == (B, S, hidden_dim)
    assert len(metrics) == NUM_LAYERS
    print("KERNEL_OK")
</pallas_src>

<mosaic_0001>
module attributes {stable_mosaic.version = 11 : i64} {
  func.func @kernel(%arg0: i32, %arg1: memref<16x32xf32, #tpu.memory_space<vmem>>, %arg2: memref<104x24xf32, #tpu.memory_space<vmem>>, %arg3: memref<16x4xf32, #tpu.memory_space<vmem>>, %arg4: memref<1x128xf32, #tpu.memory_space<vmem>>, %arg5: memref<1x128xf32, #tpu.memory_space<vmem>>) attributes {dimension_semantics = [#tpu.dimension_semantics<arbitrary>], iteration_bounds = array<i64: 1>, scalar_prefetch = 0 : i64, scratch_operands = 1 : i64, tpu.core_type = #tpu.core_type<tc>, window_params = [{transform_indices = @transform_0, window_bounds = array<i64: 16, 32>}, {pipeline_mode = #tpu.pipeline_mode<synchronous>, transform_indices = @transform_1, window_bounds = array<i64: 104, 24>}, {transform_indices = @transform_2, window_bounds = array<i64: 16, 4>}, {pipeline_mode = #tpu.pipeline_mode<synchronous>, transform_indices = @transform_3, window_bounds = array<i64: 1, 128>}]} {
    %c0_i32 = arith.constant 0 : i32
    %0 = arith.cmpi eq, %arg0, %c0_i32 : i32
    %1 = arith.extui %0 : i1 to i32
    %c0_i32_0 = arith.constant 0 : i32
    %2 = arith.cmpi ne, %1, %c0_i32_0 : i32
    scf.if %2 {
      %cst_43 = arith.constant 0.000000e+00 : f32
      %103 = vector.broadcast %cst_43 : f32 to vector<1x128xf32>
      %c0_44 = arith.constant 0 : index
      %c0_45 = arith.constant 0 : index
      %104 = vector.load %arg5[%c0_44, %c0_45] : memref<1x128xf32, #tpu.memory_space<vmem>>, vector<1x128xf32>
      tpu.vector_store %arg5[%c0_44, %c0_45], %103 {strides = array<i32>} : memref<1x128xf32, #tpu.memory_space<vmem>>, vector<1x128xf32>,
    } else {
    }
    %c0 = arith.constant 0 : index
    %c0_1 = arith.constant 0 : index
    %3 = vector.load %arg1[%c0, %c0_1] : memref<16x32xf32, #tpu.memory_space<vmem>>, vector<16x32xf32>
    %c0_2 = arith.constant 0 : index
    %c0_3 = arith.constant 0 : index
    %4 = vector.load %arg2[%c0_2, %c0_3] : memref<104x24xf32, #tpu.memory_space<vmem>>, vector<32x20xf32>
    %c96 = arith.constant 96 : index
    %c0_4 = arith.constant 0 : index
    %5 = vector.load %arg2[%c96, %c0_4] : memref<104x24xf32, #tpu.memory_space<vmem>>, vector<1x20xf32>
    %c32 = arith.constant 32 : index
    %c0_5 = arith.constant 0 : index
    %6 = vector.load %arg2[%c32, %c0_5] : memref<104x24xf32, #tpu.memory_space<vmem>>, vector<20x12xf32>
    %c97 = arith.constant 97 : index
    %c0_6 = arith.constant 0 : index
    %7 = vector.load %arg2[%c97, %c0_6] : memref<104x24xf32, #tpu.memory_space<vmem>>, vector<1x12xf32>
    %cst = arith.constant dense<0.000000e+00> : vector<16x20xf32>
    %8 = tpu.matmul %3, %4, %cst {dimension_numbers = #tpu.dot_dimension_numbers<[1], [0], [0], [1], [0, 0, 1, 1], [], []>} : vector<16x32xf32>, vector<32x20xf32>, vector<16x20xf32> -> vector<16x20xf32>
    %9 = vector.broadcast %5 : vector<1x20xf32> to vector<16x20xf32>
    %10 = arith.addf %8, %9 : vector<16x20xf32>
    %11 = tpu.iota {dimensions = array<i32: 1>} : vector<16x20xi32>
    %c4_i32 = arith.constant 4 : i32
    %12 = vector.broadcast %c4_i32 : i32 to vector<16x20xi32>
    %13 = arith.cmpi slt, %11, %12 : vector<16x20xi32>
    %14 = arith.negf %10 : vector<16x20xf32>
    %15 = math.exp %14 : vector<16x20xf32>
    %cst_7 = arith.constant 1.000000e+00 : f32
    %16 = vector.broadcast %cst_7 : f32 to vector<16x20xf32>
    %17 = arith.addf %16, %15 : vector<16x20xf32>
    %18 = arith.divf %16, %17 : vector<16x20xf32>
    %19 = arith.mulf %10, %18 : vector<16x20xf32>
    %20 = arith.select %13, %10, %19 : vector<16x20xi1>, vector<16x20xf32>
    %cst_8 = arith.constant dense<0.000000e+00> : vector<16x12xf32>
    %21 = tpu.matmul %20, %6, %cst_8 {dimension_numbers = #tpu.dot_dimension_numbers<[1], [0], [0], [1], [0, 0, 1, 1], [], []>} : vector<16x20xf32>, vector<20x12xf32>, vector<16x12xf32> -> vector<16x12xf32>
    %22 = vector.broadcast %7 : vector<1x12xf32> to vector<16x12xf32>
    %23 = arith.addf %21, %22 : vector<16x12xf32>
    %cst_9 = arith.constant dense<0.000000e+00> : vector<12xf32>
    %24 = vector.multi_reduction <add>, %23, %cst_9 [0] : vector<16x12xf32> to vector<12xf32>
    %25 = vector.shape_cast %24 : vector<12xf32> to vector<1x12xf32>
    %26 = arith.mulf %23, %23 : vector<16x12xf32>
    %cst_10 = arith.constant dense<0.000000e+00> : vector<12xf32>
    %27 = vector.multi_reduction <add>, %26, %cst_10 [0] : vector<16x12xf32> to vector<12xf32>
    %28 = vector.shape_cast %27 : vector<12xf32> to vector<1x12xf32>
    %29 = vector.extract_strided_slice %25 {offsets = [0, 0], sizes = [1, 4], strides = [1, 1]} : vector<1x12xf32> to vector<1x4xf32>
    %30 = tpu.concatenate %29, %28 in 1 : vector<1x4xf32>, vector<1x12xf32> -> vector<1x16xf32>
    %31 = vector.extract_strided_slice %23 {offsets = [0, 0], sizes = [16, 4], strides = [1, 1]} : vector<16x12xf32> to vector<16x4xf32>
    %c56 = arith.constant 56 : index
    %c0_11 = arith.constant 0 : index
    %32 = vector.load %arg2[%c56, %c0_11] : memref<104x24xf32, #tpu.memory_space<vmem>>, vector<4x6xf32>
    %c98 = arith.constant 98 : index
    %c0_12 = arith.constant 0 : index
    %33 = vector.load %arg2[%c98, %c0_12] : memref<104x24xf32, #tpu.memory_space<vmem>>, vector<1x6xf32>
    %c64 = arith.constant 64 : index
    %c0_13 = arith.constant 0 : index
    %34 = vector.load %arg2[%c64, %c0_13] : memref<104x24xf32, #tpu.memory_space<vmem>>, vector<6x12xf32>
    %c99 = arith.constant 99 : index
    %c0_14 = arith.constant 0 : index
    %35 = vector.load %arg2[%c99, %c0_14] : memref<104x24xf32, #tpu.memory_space<vmem>>, vector<1x12xf32>
    %cst_15 = arith.constant dense<0.000000e+00> : vector<16x6xf32>
    %36 = tpu.matmul %31, %32, %cst_15 {dimension_numbers = #tpu.dot_dimension_numbers<[1], [0], [0], [1], [0, 0, 1, 1], [], []>} : vector<16x4xf32>, vector<4x6xf32>, vector<16x6xf32> -> vector<16x6xf32>
    %37 = vector.broadcast %33 : vector<1x6xf32> to vector<16x6xf32>
    %38 = arith.addf %36, %37 : vector<16x6xf32>
    %39 = tpu.iota {dimensions = array<i32: 1>} : vector<16x6xi32>
    %c4_i32_16 = arith.constant 4 : i32
    %40 = vector.broadcast %c4_i32_16 : i32 to vector<16x6xi32>
    %41 = arith.cmpi slt, %39, %40 : vector<16x6xi32>
    %42 = arith.negf %38 : vector<16x6xf32>
    %43 = math.exp %42 : vector<16x6xf32>
    %cst_17 = arith.constant 1.000000e+00 : f32
    %44 = vector.broadcast %cst_17 : f32 to vector<16x6xf32>
    %45 = arith.addf %44, %43 : vector<16x6xf32>
    %46 = arith.divf %44, %45 : vector<16x6xf32>
    %47 = arith.mulf %38, %46 : vector<16x6xf32>
    %48 = arith.select %41, %38, %47 : vector<16x6xi1>, vector<16x6xf32>
    %cst_18 = arith.constant dense<0.000000e+00> : vector<16x12xf32>
    %49 = tpu.matmul %48, %34, %cst_18 {dimension_numbers = #tpu.dot_dimension_numbers<[1], [0], [0], [1], [0, 0, 1, 1], [], []>} : vector<16x6xf32>, vector<6x12xf32>, vector<16x12xf32> -> vector<16x12xf32>
    %50 = vector.broadcast %35 : vector<1x12xf32> to vector<16x12xf32>
    %51 = arith.addf %49, %50 : vector<16x12xf32>
    %cst_19 = arith.constant dense<0.000000e+00> : vector<12xf32>
    %52 = vector.multi_reduction <add>, %51, %cst_19 [0] : vector<16x12xf32> to vector<12xf32>
    %53 = vector.shape_cast %52 : vector<12xf32> to vector<1x12xf32>
    %54 = arith.mulf %51, %51 : vector<16x12xf32>
    %cst_20 = arith.constant dense<0.000000e+00> : vector<12xf32>
    %55 = vector.multi_reduction <add>, %54, %cst_20 [0] : vector<16x12xf32> to vector<12xf32>
    %56 = vector.shape_cast %55 : vector<12xf32> to vector<1x12xf32>
    %57 = vector.extract_strided_slice %53 {offsets = [0, 0], sizes = [1, 4], strides = [1, 1]} : vector<1x12xf32> to vector<1x4xf32>
    %58 = tpu.concatenate %57, %56 in 1 : vector<1x4xf32>, vector<1x12xf32> -> vector<1x16xf32>
    %59 = vector.extract_strided_slice %51 {offsets = [0, 0], sizes = [16, 4], strides = [1, 1]} : vector<16x12xf32> to vector<16x4xf32>
    %c72 = arith.constant 72 : index
    %c0_21 = arith.constant 0 : index
    %60 = vector.load %arg2[%c72, %c0_21] : memref<104x24xf32, #tpu.memory_space<vmem>>, vector<4x6xf32>
    %c100 = arith.constant 100 : index
    %c0_22 = arith.constant 0 : index
    %61 = vector.load %arg2[%c100, %c0_22] : memref<104x24xf32, #tpu.memory_space<vmem>>, vector<1x6xf32>
    %c80 = arith.constant 80 : index
    %c0_23 = arith.constant 0 : index
    %62 = vector.load %arg2[%c80, %c0_23] : memref<104x24xf32, #tpu.memory_space<vmem>>, vector<6x12xf32>
    %c101 = arith.constant 101 : index
    %c0_24 = arith.constant 0 : index
    %63 = vector.load %arg2[%c101, %c0_24] : memref<104x24xf32, #tpu.memory_space<vmem>>, vector<1x12xf32>
    %cst_25 = arith.constant dense<0.000000e+00> : vector<16x6xf32>
    %64 = tpu.matmul %59, %60, %cst_25 {dimension_numbers = #tpu.dot_dimension_numbers<[1], [0], [0], [1], [0, 0, 1, 1], [], []>} : vector<16x4xf32>, vector<4x6xf32>, vector<16x6xf32> -> vector<16x6xf32>
    %65 = vector.broadcast %61 : vector<1x6xf32> to vector<16x6xf32>
    %66 = arith.addf %64, %65 : vector<16x6xf32>
    %67 = tpu.iota {dimensions = array<i32: 1>} : vector<16x6xi32>
    %c4_i32_26 = arith.constant 4 : i32
    %68 = vector.broadcast %c4_i32_26 : i32 to vector<16x6xi32>
    %69 = arith.cmpi slt, %67, %68 : vector<16x6xi32>
    %70 = arith.negf %66 : vector<16x6xf32>
    %71 = math.exp %70 : vector<16x6xf32>
    %cst_27 = arith.constant 1.000000e+00 : f32
    %72 = vector.broadcast %cst_27 : f32 to vector<16x6xf32>
    %73 = arith.addf %72, %71 : vector<16x6xf32>
    %74 = arith.divf %72, %73 : vector<16x6xf32>
    %75 = arith.mulf %66, %74 : vector<16x6xf32>
    %76 = arith.select %69, %66, %75 : vector<16x6xi1>, vector<16x6xf32>
    %cst_28 = arith.constant dense<0.000000e+00> : vector<16x12xf32>
    %77 = tpu.matmul %76, %62, %cst_28 {dimension_numbers = #tpu.dot_dimension_numbers<[1], [0], [0], [1], [0, 0, 1, 1], [], []>} : vector<16x6xf32>, vector<6x12xf32>, vector<16x12xf32> -> vector<16x12xf32>
    %78 = vector.broadcast %63 : vector<1x12xf32> to vector<16x12xf32>
    %79 = arith.addf %77, %78 : vector<16x12xf32>
    %cst_29 = arith.constant dense<0.000000e+00> : vector<12xf32>
    %80 = vector.multi_reduction <add>, %79, %cst_29 [0] : vector<16x12xf32> to vector<12xf32>
    %81 = vector.shape_cast %80 : vector<12xf32> to vector<1x12xf32>
    %82 = arith.mulf %79, %79 : vector<16x12xf32>
    %cst_30 = arith.constant dense<0.000000e+00> : vector<12xf32>
    %83 = vector.multi_reduction <add>, %82, %cst_30 [0] : vector<16x12xf32> to vector<12xf32>
    %84 = vector.shape_cast %83 : vector<12xf32> to vector<1x12xf32>
    %85 = vector.extract_strided_slice %81 {offsets = [0, 0], sizes = [1, 4], strides = [1, 1]} : vector<1x12xf32> to vector<1x4xf32>
    %86 = tpu.concatenate %85, %84 in 1 : vector<1x4xf32>, vector<1x12xf32> -> vector<1x16xf32>
    %87 = vector.extract_strided_slice %79 {offsets = [0, 0], sizes = [16, 4], strides = [1, 1]} : vector<16x12xf32> to vector<16x4xf32>
    %88 = tpu.concatenate %30, %58, %86 in 1 : vector<1x16xf32>, vector<1x16xf32>, vector<1x16xf32> -> vector<1x48xf32>
    %cst_31 = arith.constant 0.000000e+00 : f32
    %89 = vector.broadcast %cst_31 : f32 to vector<1x80xf32>
    %c0_32 = arith.constant 0 : index
    %c0_33 = arith.constant 0 : index
    %90 = vector.load %arg5[%c0_32, %c0_33] : memref<1x128xf32, #tpu.memory_space<vmem>>, vector<1x128xf32>
    %91 = tpu.concatenate %88, %89 in 1 : vector<1x48xf32>, vector<1x80xf32> -> vector<1x128xf32>
    %92 = arith.addf %90, %91 : vector<1x128xf32>
    %c0_34 = arith.constant 0 : index
    %c0_35 = arith.constant 0 : index
    %93 = vector.load %arg5[%c0_34, %c0_35] : memref<1x128xf32, #tpu.memory_space<vmem>>, vector<1x128xf32>
    tpu.vector_store %arg5[%c0_34, %c0_35], %92 {strides = array<i32>} : memref<1x128xf32, #tpu.memory_space<vmem>>, vector<1x128xf32>,
    %c88 = arith.constant 88 : index
    %c0_36 = arith.constant 0 : index
    %94 = vector.load %arg2[%c88, %c0_36] : memref<104x24xf32, #tpu.memory_space<vmem>>, vector<4x4xf32>
    %c102 = arith.constant 102 : index
    %c0_37 = arith.constant 0 : index
    %95 = vector.load %arg2[%c102, %c0_37] : memref<104x24xf32, #tpu.memory_space<vmem>>, vector<1x4xf32>
    %cst_38 = arith.constant dense<0.000000e+00> : vector<16x4xf32>
    %96 = tpu.matmul %87, %94, %cst_38 {dimension_numbers = #tpu.dot_dimension_numbers<[1], [0], [0], [1], [0, 0, 1, 1], [], []>} : vector<16x4xf32>, vector<4x4xf32>, vector<16x4xf32> -> vector<16x4xf32>
    %97 = vector.broadcast %95 : vector<1x4xf32> to vector<16x4xf32>
    %98 = arith.addf %96, %97 : vector<16x4xf32>
    %c0_39 = arith.constant 0 : index
    %c0_40 = arith.constant 0 : index
    %99 = vector.load %arg3[%c0_39, %c0_40] : memref<16x4xf32, #tpu.memory_space<vmem>>, vector<16x4xf32>
    tpu.vector_store %arg3[%c0_39, %c0_40], %98 {strides = array<i32>} : memref<16x4xf32, #tpu.memory_space<vmem>>, vector<16x4xf32>,
    %c0_i32_41 = arith.constant 0 : i32
    %100 = arith.cmpi eq, %arg0, %c0_i32_41 : i32
    %101 = arith.extui %100 : i1 to i32
    %c0_i32_42 = arith.constant 0 : i32
    %102 = arith.cmpi ne, %101, %c0_i32_42 : i32
    scf.if %102 {
      %c0_43 = arith.constant 0 : index
      %c0_44 = arith.constant 0 : index
      %103 = vector.load %arg5[%c0_43, %c0_44] : memref<1x128xf32, #tpu.memory_space<vmem>>, vector<1x128xf32>
      %c0_45 = arith.constant 0 : index
      %c0_46 = arith.constant 0 : index
      %104 = vector.load %arg4[%c0_45, %c0_46] : memref<1x128xf32, #tpu.memory_space<vmem>>, vector<1x128xf32>
      tpu.vector_store %arg4[%c0_45, %c0_46], %103 {strides = array<i32>} : memref<1x128xf32, #tpu.memory_space<vmem>>, vector<1x128xf32>,
    } else {
    }
    return
  }
  func.func @transform_0(%arg0: i32) -> (i32, i32) {
    %c0_i32 = arith.constant 0 : i32
    %c0_i32_0 = arith.constant 0 : i32
    return %arg0, %c0_i32 : i32, i32
  }
  func.func @transform_1(%arg0: i32) -> (i32, i32) {
    %c0_i32 = arith.constant 0 : i32
    %c0_i32_0 = arith.constant 0 : i32
    %c0_i32_1 = arith.constant 0 : i32
    return %c0_i32, %c0_i32_0 : i32, i32
  }
  func.func @transform_2(%arg0: i32) -> (i32, i32) {
    %c0_i32 = arith.constant 0 : i32
    %c0_i32_0 = arith.constant 0 : i32
    return %arg0, %c0_i32 : i32, i32
  }
  func.func @transform_3(%arg0: i32) -> (i32, i32) {
    %c0_i32 = arith.constant 0 : i32
    %c0_i32_0 = arith.constant 0 : i32
    %c0_i32_1 = arith.constant 0 : i32
    return %c0_i32, %c0_i32_0 : i32, i32
  }
}

</mosaic_0001>

<llo_original>
// kernel: squeeze.5
$region0: #{squeeze.5}
  %s0 = inlined_call_operand.vmem [shape: f32[48], index: 0, kind: input, shape index: {}]
  %s1 = inlined_call_operand.vmem [shape: f32[3,4,4], index: 1, kind: output, shape index: {}]
  $region1: #{squeeze.5} parent=0
    #allocation0 [shape = 'u8[12288]{0}', space=vmem, size = 0x3000, scoped, tag = 'scoped mem for output reshape']
    #allocation1 [shape = 'u8[4096]{0}', space=vmem, size = 0x1000, scoped, tag = 'scoped mem for input reshape']
    %s3 = sshll.u32 1, 1
    %s4 = ssub.s32 %s3, 1
    %v5 = vld [vmem:[%s0] sm:%s4]
    %6 = vst [vmem:[#allocation1] sm:%s4] %v5
    %v7 = vld [vmem:[#allocation1] sm:$0x1]
    %vm8 = vcmask 31744
    %9 = vst.msk [vmem:[#allocation0] sm:$0x1] %vm8, %v7
    %v10 = vld [vmem:[#allocation1] sm:$0x1]
    %11 = vrot.lane.b32.xlu0 %v10, 124
    %v12 = vpop.permute.xlu0 %11
    %vm13 = vcmask 31744
    %s14 = scalar_lea.vmem [#allocation0], 1
    %15 = vst.msk [vmem:[%s14] sm:$0x1] %vm13, %v12
    %v16 = vld [vmem:[#allocation1] sm:$0x1]
    %17 = vrot.lane.b32.xlu0 %v16, 120
    %v18 = vpop.permute.xlu0 %17
    %vm19 = vcmask 31744
    %s20 = scalar_lea.vmem [#allocation0], 2
    %21 = vst.msk [vmem:[%s20] sm:$0x1] %vm19, %v18
    %v22 = vld [vmem:[#allocation1] sm:$0x1]
    %23 = vrot.lane.b32.xlu0 %v22, 116
    %v24 = vpop.permute.xlu0 %23
    %vm25 = vcmask 31744
    %s26 = scalar_lea.vmem [#allocation0], 3
    %27 = vst.msk [vmem:[%s26] sm:$0x1] %vm25, %v24
    %v28 = vld [vmem:[#allocation1] sm:$0x1]
    %29 = vrot.lane.b32.xlu0 %v28, 112
    %v30 = vpop.permute.xlu0 %29
    %vm31 = vcmask 31744
    %s32 = scalar_lea.vmem [#allocation0], 8
    %33 = vst.msk [vmem:[%s32] sm:$0x1] %vm31, %v30
    %v34 = vld [vmem:[#allocation1] sm:$0x1]
    %35 = vrot.lane.b32.xlu0 %v34, 108
    %v36 = vpop.permute.xlu0 %35
    %vm37 = vcmask 31744
    %s38 = scalar_lea.vmem [#allocation0], 9
    %39 = vst.msk [vmem:[%s38] sm:$0x1] %vm37, %v36
    %v40 = vld [vmem:[#allocation1] sm:$0x1]
    %41 = vrot.lane.b32.xlu0 %v40, 104
    %v42 = vpop.permute.xlu0 %41
    %vm43 = vcmask 31744
    %s44 = scalar_lea.vmem [#allocation0], 10
    %45 = vst.msk [vmem:[%s44] sm:$0x1] %vm43, %v42
    %v46 = vld [vmem:[#allocation1] sm:$0x1]
    %47 = vrot.lane.b32.xlu0 %v46, 100
    %v48 = vpop.permute.xlu0 %47
    %vm49 = vcmask 31744
    %s50 = scalar_lea.vmem [#allocation0], 11
    %51 = vst.msk [vmem:[%s50] sm:$0x1] %vm49, %v48
    %v52 = vld [vmem:[#allocation1] sm:$0x1]
    %53 = vrot.lane.b32.xlu0 %v52, 96
    %v54 = vpop.permute.xlu0 %53
    %vm55 = vcmask 31744
    %s56 = scalar_lea.vmem [#allocation0], 16
    %57 = vst.msk [vmem:[%s56] sm:$0x1] %vm55, %v54
    %v58 = vld [vmem:[#allocation1] sm:$0x1]
    %59 = vrot.lane.b32.xlu0 %v58, 92
    %v60 = vpop.permute.xlu0 %59
    %vm61 = vcmask 31744
    %s62 = scalar_lea.vmem [#allocation0], 17
    %63 = vst.msk [vmem:[%s62] sm:$0x1] %vm61, %v60
    %v64 = vld [vmem:[#allocation1] sm:$0x1]
    %65 = vrot.lane.b32.xlu0 %v64, 88
    %v66 = vpop.permute.xlu0 %65
    %vm67 = vcmask 31744
    %s68 = scalar_lea.vmem [#allocation0], 18
    %69 = vst.msk [vmem:[%s68] sm:$0x1] %vm67, %v66
    %v70 = vld [vmem:[#allocation1] sm:$0x1]
    %71 = vrot.lane.b32.xlu0 %v70, 84
    %v72 = vpop.permute.xlu0 %71
    %vm73 = vcmask 31744
    %s74 = scalar_lea.vmem [#allocation0], 19
    %75 = vst.msk [vmem:[%s74] sm:$0x1] %vm73, %v72
    %s77 = sshll.u32 1, 4
    %s78 = ssub.s32 %s77, 1
    %v80 = vld [vmem:[#allocation0] sm:%s78]
    %s81 = sshll.u32 1, 4
    %s82 = ssub.s32 %s81, 1
    %83 = vst [vmem:[%s1] sm:%s82] %v80
    %s84 = scalar_lea.vmem [#allocation0], 8
    %v85 = vld [vmem:[%s84] sm:%s78]
    %s86 = sshll.u32 1, 4
    %s87 = ssub.s32 %s86, 1
    %s88 = scalar_lea.vmem %s1, 4
    %89 = vst [vmem:[%s88] sm:%s87] %v85
    %s90 = scalar_lea.vmem [#allocation0], 16
    %v91 = vld [vmem:[%s90] sm:%s78]
    %s92 = sshll.u32 1, 4
    %s93 = ssub.s32 %s92, 1
    %s94 = smul.addr 4, 2
    %s95 = scalar_lea.vmem %s1, %s94
    %96 = vst [vmem:[%s95] sm:%s93] %v91

// kernel: forward.1
$region0: #{forward.1}
  #allocation0 [shape = 'u32[]', space=smem, size = 0x4, offset = 0x4, fixed_abs, tag = 'smem constant byte address 0x4 - core index']
  #allocation1 [shape = 'u32[144,128]{1,0:T(1,128)}', space=vmem, size = 0x12000, scoped, tag = 'internal scratch']
  #allocation2 [shape = 'f32[1,128]{1,0:T(1,128)}', space=vmem, size = 0x200, scoped, tag = 'scratch operand']
  %s0 = inlined_call_operand.vmem [shape: f32[16,32], index: 0, kind: input, shape index: {}]
  %s1 = inlined_call_operand.vmem [shape: f32[104,24], index: 1, kind: input, shape index: {}]
  %s2 = inlined_call_operand.vmem [shape: f32[16,4], index: 2, kind: output, shape index: {0}]
  %s3 = inlined_call_operand.vmem [shape: f32[1,128], index: 3, kind: output, shape index: {1}]
  %4 = xla_tuple %s2, %s3
  %s5 = sld [smem:[#allocation0]]
  $region34: #{forward.1} parent=0
    _
  %s7 = ssub.s32 1, %s5
  %s8 = scalar_select 0, %s7, %s5
  // Predicated region
  $region2: #{forward.1} parent=0 // pred_check
    _
  $region3: #{forward.1} parent=0 // pred_check_branch
    %10 = sbr.rel (0) target = $region5
  $region4: #{forward.1} parent=0 // pred_region
    _
  $region5: #{forward.1} parent=0 // pred_fallthru
    _
  // Predicated region
  $region6: #{forward.1} parent=0 // pred_check
    _
  $region7: #{forward.1} parent=0 // pred_check_branch
    %12 = sbr.rel (0) target = $region9
  $region8: #{forward.1} parent=0 // pred_region
    _
  $region9: #{forward.1} parent=0 // pred_fallthru
    _
  %p13 = scmp.eq.s32.totalorder 0, 0
  // Predicated region
  $region10: #{forward.1} parent=0 // pred_check
    %p14 = pneg %p13
  $region11: #{forward.1} parent=0 // pred_check_branch
    %16 = sbr.rel (%p14) target = $region13
  $region12: #{forward.1} parent=0 // pred_region
    %17 = vst [vmem:[#allocation2] sm:$0x1] 0.0
  $region13: #{forward.1} parent=0 // pred_fallthru
    _
  %v18 = vld [vmem:[%s0] sm:$0xff]
  %v19 = vld [vmem:[%s0 + $0x8] sm:$0xff]
  %v20 = vld [vmem:[%s1] sm:$0xff]
  %v21 = vld [vmem:[%s1 + $0x8] sm:$0xff]
  %v22 = vld [vmem:[%s1 + $0x10] sm:$0xff]
  %v23 = vld [vmem:[%s1 + $0x18] sm:$0xff]
  %v24 = vld [vmem:[%s1 + $0x60] sm:$0x1]
  %v25 = vld [vmem:[%s1 + $0x20] sm:$0xff]
  %v26 = vld [vmem:[%s1 + $0x28] sm:$0xff]
  %v27 = vld [vmem:[%s1 + $0x30] sm:$0xf]
  %v28 = vld [vmem:[%s1 + $0x61] sm:$0x1]
  %v29 = vlaneseq
  %v30 = vshrl.u32 %v29, 7
  %v31 = vsub.s32 0, %v30
  %v32 = vrot.slane %v24, %v31
  %vm33 = vcmask 261120
  %v35 = vsel %vm33, %v18, 0
  %v38 = vsel %vm33, %v19, 0
  %40 = vmatprep.subr.mxu0 0.0
  %41 = vmatpush1.msra.mxu0 0.0
  %42 = vmatprep.subr.mxu0 0.0
  %43 = vmatpush1.msra.mxu0 0.0
  %44 = vmatprep.subr.mxu0 0.0
  %45 = vmatpush1.msra.mxu0 0.0
  %46 = vmatprep.subr.mxu0 0.0
  %47 = vmatpush1.msra.mxu0 0.0
  %48 = vmatprep.subr.mxu0 0.0
  %49 = vmatpush1.msra.mxu0 0.0
  %50 = vmatprep.subr.mxu0 0.0
  %51 = vmatpush1.msra.mxu0 0.0
  %52 = vmatprep.subr.mxu0 0.0
  %53 = vmatpush1.msra.mxu0 0.0
  %54 = vmatprep.subr.mxu0 0.0
  %55 = vmatpush1.msra.mxu0 0.0
  %56 = vmatprep.subr.mxu0 0.0
  %57 = vmatpush1.msra.mxu0 0.0
  %58 = vmatprep.subr.mxu0 0.0
  %59 = vmatpush1.msra.mxu0 0.0
  %60 = vmatprep.subr.mxu0 0.0
  %61 = vmatpush1.msra.mxu0 0.0
  %62 = vmatprep.subr.mxu0 0.0
  %63 = vmatpush1.msra.mxu0 0.0
  %64 = vmatprep.subr.mxu0 0.0
  %65 = vmatpush1.msra.mxu0 %v23
  %66 = vmatprep.subr.mxu0 0.0
  %67 = vmatpush1.msra.mxu0 %v22
  %68 = vmatprep.subr.mxu0 0.0
  %69 = vmatpush1.msra.mxu0 %v21
  %70 = vmatprep.subr.mxu0 0.0
  %71 = vmatpush1.msra.mxu0 %v20
  %72 = vmatprep.subr.mxu0 0.0
  %73 = vmatpush2.msra.mxu0 0.0
  %74 = vmatprep.subr.mxu0 0.0
  %75 = vmatpush2.msra.mxu0 0.0
  %76 = vmatprep.subr.mxu0 0.0
  %77 = vmatpush2.msra.mxu0 0.0
  %78 = vmatprep.subr.mxu0 0.0
  %79 = vmatpush2.msra.mxu0 0.0
  %80 = vmatprep.subr.mxu0 0.0
  %81 = vmatpush2.msra.mxu0 0.0
  %82 = vmatprep.subr.mxu0 0.0
  %83 = vmatpush2.msra.mxu0 0.0
  %84 = vmatprep.subr.mxu0 0.0
  %85 = vmatpush2.msra.mxu0 0.0
  %86 = vmatprep.subr.mxu0 0.0
  %87 = vmatpush2.msra.mxu0 0.0
  %88 = vmatprep.subr.mxu0 0.0
  %89 = vmatpush2.msra.mxu0 0.0
  %90 = vmatprep.subr.mxu0 0.0
  %91 = vmatpush2.msra.mxu0 0.0
  %92 = vmatprep.subr.mxu0 0.0
  %93 = vmatpush2.msra.mxu0 0.0
  %94 = vmatprep.subr.mxu0 0.0
  %95 = vmatpush2.msra.mxu0 0.0
  %96 = vmatprep.subr.mxu0 0.0
  %97 = vmatpush2.msra.mxu0 0.0
  %98 = vmatprep.subr.mxu0 0.0
  %99 = vmatpush2.msra.mxu0 0.0
  %100 = vmatprep.subr.mxu0 0.0
  %101 = vmatpush2.msra.mxu0 0.0
  %102 = vmatprep.subr.mxu0 0.0
  %103 = vmatpush2.msra.mxu0 0.0
  %104 = vmatprep.mubr.f32.mxu0 0.0
  %105 = vmatmul.mubr.f32.gmra.mxu0 %v35
  %v106 = vpop.f32.mrf.mxu0
  %v107 = vadd.f32 %v32, %v106
  %v108 = vpop.f32.mrf.mxu0
  %109 = vmatprep.mubr.f32.mxu0 0.0
  %110 = vmatmul.mubr.f32.gmra.mxu0 %v38
  %v111 = vpop.f32.mrf.mxu0
  %v112 = vadd.f32 %v32, %v111
  %v113 = vpop.f32.mrf.mxu0
  %114 = vdwg.mxu0
  %v115 = vlaneseq
  %v116 = vand.u32 %v115, 127
  %vm117 = vcmp.lt.s32.totalorder %v116, 4
  %v118 = vxor.u32 %v107, 2147483648
  %v119 = vxor.u32 %v112, 2147483648
  %v120 = vmul.f32 %v118, 1.442695
  %v121 = vpow.pop %v120
  %v122 = vmul.f32 %v119, 1.442695
  %v123 = vpow.pop %v122
  %v124 = vadd.f32 %v121, 1.0
  %v125 = vadd.f32 %v123, 1.0
  %v126 = vrcp.pop %v124
  %v127 = vmul.f32 1.0, %v126
  %v128 = vrcp.pop %v125
  %v129 = vmul.f32 1.0, %v128
  %v130 = vmul.f32 %v107, %v127
  %v131 = vmul.f32 %v112, %v129
  %v132 = vsel %vm117, %v107, %v130
  %v133 = vsel %vm117, %v112, %v131
  %v134 = vlaneseq
  %v135 = vshrl.u32 %v134, 7
  %v136 = vsub.s32 0, %v135
  %v137 = vrot.slane %v28, %v136
  %vm138 = vcmask 162816
  %v140 = vsel %vm138, %v132, 0
  %v143 = vsel %vm138, %v133, 0
  %vm145 = vcmask 1043456
  %v147 = vsel %vm145, %v27, 0
  %149 = vmatprep.subr.mxu0 0.0
  %150 = vmatpush1.msra.mxu0 0.0
  %151 = vmatprep.subr.mxu0 0.0
  %152 = vmatpush1.msra.mxu0 0.0
  %153 = vmatprep.subr.mxu0 0.0
  %154 = vmatpush1.msra.mxu0 0.0
  %155 = vmatprep.subr.mxu0 0.0
  %156 = vmatpush1.msra.mxu0 0.0
  %157 = vmatprep.subr.mxu0 0.0
  %158 = vmatpush1.msra.mxu0 0.0
  %159 = vmatprep.subr.mxu0 0.0
  %160 = vmatpush1.msra.mxu0 0.0
  %161 = vmatprep.subr.mxu0 0.0
  %162 = vmatpush1.msra.mxu0 0.0
  %163 = vmatprep.subr.mxu0 0.0
  %164 = vmatpush1.msra.mxu0 0.0
  %165 = vmatprep.subr.mxu0 0.0
  %166 = vmatpush1.msra.mxu0 0.0
  %167 = vmatprep.subr.mxu0 0.0
  %168 = vmatpush1.msra.mxu0 0.0
  %169 = vmatprep.subr.mxu0 0.0
  %170 = vmatpush1.msra.mxu0 0.0
  %171 = vmatprep.subr.mxu0 0.0
  %172 = vmatpush1.msra.mxu0 0.0
  %173 = vmatprep.subr.mxu0 0.0
  %174 = vmatpush1.msra.mxu0 0.0
  %175 = vmatprep.subr.mxu0 0.0
  %176 = vmatpush1.msra.mxu0 %v147
  %177 = vmatprep.subr.mxu0 0.0
  %178 = vmatpush1.msra.mxu0 %v26
  %179 = vmatprep.subr.mxu0 0.0
  %180 = vmatpush1.msra.mxu0 %v25
  %181 = vmatprep.subr.mxu0 0.0
  %182 = vmatpush2.msra.mxu0 0.0
  %183 = vmatprep.subr.mxu0 0.0
  %184 = vmatpush2.msra.mxu0 0.0
  %185 = vmatprep.subr.mxu0 0.0
  %186 = vmatpush2.msra.mxu0 0.0
  %187 = vmatprep.subr.mxu0 0.0
  %188 = vmatpush2.msra.mxu0 0.0
  %189 = vmatprep.subr.mxu0 0.0
  %190 = vmatpush2.msra.mxu0 0.0
  %191 = vmatprep.subr.mxu0 0.0
  %192 = vmatpush2.msra.mxu0 0.0
  %193 = vmatprep.subr.mxu0 0.0
  %194 = vmatpush2.msra.mxu0 0.0
  %195 = vmatprep.subr.mxu0 0.0
  %196 = vmatpush2.msra.mxu0 0.0
  %197 = vmatprep.subr.mxu0 0.0
  %198 = vmatpush2.msra.mxu0 0.0
  %199 = vmatprep.subr.mxu0 0.0
  %200 = vmatpush2.msra.mxu0 0.0
  %201 = vmatprep.subr.mxu0 0.0
  %202 = vmatpush2.msra.mxu0 0.0
  %203 = vmatprep.subr.mxu0 0.0
  %204 = vmatpush2.msra.mxu0 0.0
  %205 = vmatprep.subr.mxu0 0.0
  %206 = vmatpush2.msra.mxu0 0.0
  %207 = vmatprep.subr.mxu0 0.0
  %208 = vmatpush2.msra.mxu0 0.0
  %209 = vmatprep.subr.mxu0 0.0
  %210 = vmatpush2.msra.mxu0 0.0
  %211 = vmatprep.subr.mxu0 0.0
  %212 = vmatpush2.msra.mxu0 0.0
  %213 = vmatprep.mubr.f32.mxu0 0.0
  %214 = vmatmul.mubr.f32.gmra.mxu0 %v140
  %v215 = vpop.f32.mrf.mxu0
  %v216 = vadd.f32 %v137, %v215
  %v217 = vpop.f32.mrf.mxu0
  %218 = vmatprep.mubr.f32.mxu0 0.0
  %219 = vmatmul.mubr.f32.gmra.mxu0 %v143
  %v220 = vpop.f32.mrf.mxu0
  %v221 = vadd.f32 %v137, %v220
  %v222 = vpop.f32.mrf.mxu0
  %223 = vdwg.mxu0
  %vm224 = vcmask 97280
  %v225 = vsel %vm224, %v216, 0.0
  %v226 = vsel %vm224, %v221, 0.0
  %v227 = vadd.f32 %v225, %v226
  %v228 = vrot.slane %v227, 4
  %v229 = vadd.f32 %v227, %v228
  %v230 = vrot.slane %v229, 2
  %v231 = vadd.f32 %v229, %v230
  %v232 = vrot.slane %v231, 1
  %v233 = vadd.f32 %v231, %v232
  %v234 = vmul.f32 %v216, %v216
  %v235 = vmul.f32 %v221, %v221
  %v236 = vsel %vm224, %v234, 0.0
  %v237 = vsel %vm224, %v235, 0.0
  %v238 = vadd.f32 %v236, %v237
  %v239 = vrot.slane %v238, 4
  %v240 = vadd.f32 %v238, %v239
  %v241 = vrot.slane %v240, 2
  %v242 = vadd.f32 %v240, %v241
  %v243 = vrot.slane %v242, 1
  %v244 = vadd.f32 %v242, %v243
  %246 = vrot.lane.b32.xlu0 %v244, 4
  %v247 = vpop.permute.xlu0 %246
  %vm249 = vcmask 31744
  %v250 = vsel %vm249, %v233, %v247
  %v251 = vld [vmem:[%s1 + $0x38] sm:$0xf]
  %v252 = vld [vmem:[%s1 + $0x62] sm:$0x1]
  %v253 = vld [vmem:[%s1 + $0x40] sm:$0x3f]
  %v254 = vld [vmem:[%s1 + $0x63] sm:$0x1]
  %v255 = vlaneseq
  %v256 = vshrl.u32 %v255, 7
  %v257 = vsub.s32 0, %v256
  %v258 = vrot.slane %v252, %v257
  %v260 = vsel %vm249, %v216, 0
  %v263 = vsel %vm249, %v221, 0
  %v266 = vsel %vm145, %v251, 0
  %268 = vmatprep.subr.mxu0 0.0
  %269 = vmatpush1.msra.mxu0 0.0
  %270 = vmatprep.subr.mxu0 0.0
  %271 = vmatpush1.msra.mxu0 0.0
  %272 = vmatprep.subr.mxu0 0.0
  %273 = vmatpush1.msra.mxu0 0.0
  %274 = vmatprep.subr.mxu0 0.0
  %275 = vmatpush1.msra.mxu0 0.0
  %276 = vmatprep.subr.mxu0 0.0
  %277 = vmatpush1.msra.mxu0 0.0
  %278 = vmatprep.subr.mxu0 0.0
  %279 = vmatpush1.msra.mxu0 0.0
  %280 = vmatprep.subr.mxu0 0.0
  %281 = vmatpush1.msra.mxu0 0.0
  %282 = vmatprep.subr.mxu0 0.0
  %283 = vmatpush1.msra.mxu0 0.0
  %284 = vmatprep.subr.mxu0 0.0
  %285 = vmatpush1.msra.mxu0 0.0
  %286 = vmatprep.subr.mxu0 0.0
  %287 = vmatpush1.msra.mxu0 0.0
  %288 = vmatprep.subr.mxu0 0.0
  %289 = vmatpush1.msra.mxu0 0.0
  %290 = vmatprep.subr.mxu0 0.0
  %291 = vmatpush1.msra.mxu0 0.0
  %292 = vmatprep.subr.mxu0 0.0
  %293 = vmatpush1.msra.mxu0 0.0
  %294 = vmatprep.subr.mxu0 0.0
  %295 = vmatpush1.msra.mxu0 0.0
  %296 = vmatprep.subr.mxu0 0.0
  %297 = vmatpush1.msra.mxu0 0.0
  %298 = vmatprep.subr.mxu0 0.0
  %299 = vmatpush1.msra.mxu0 %v266
  %300 = vmatprep.subr.mxu0 0.0
  %301 = vmatpush2.msra.mxu0 0.0
  %302 = vmatprep.subr.mxu0 0.0
  %303 = vmatpush2.msra.mxu0 0.0
  %304 = vmatprep.subr.mxu0 0.0
  %305 = vmatpush2.msra.mxu0 0.0
  %306 = vmatprep.subr.mxu0 0.0
  %307 = vmatpush2.msra.mxu0 0.0
  %308 = vmatprep.subr.mxu0 0.0
  %309 = vmatpush2.msra.mxu0 0.0
  %310 = vmatprep.subr.mxu0 0.0
  %311 = vmatpush2.msra.mxu0 0.0
  %312 = vmatprep.subr.mxu0 0.0
  %313 = vmatpush2.msra.mxu0 0.0
  %314 = vmatprep.subr.mxu0 0.0
  %315 = vmatpush2.msra.mxu0 0.0
  %316 = vmatprep.subr.mxu0 0.0
  %317 = vmatpush2.msra.mxu0 0.0
  %318 = vmatprep.subr.mxu0 0.0
  %319 = vmatpush2.msra.mxu0 0.0
  %320 = vmatprep.subr.mxu0 0.0
  %321 = vmatpush2.msra.mxu0 0.0
  %322 = vmatprep.subr.mxu0 0.0
  %323 = vmatpush2.msra.mxu0 0.0
  %324 = vmatprep.subr.mxu0 0.0
  %325 = vmatpush2.msra.mxu0 0.0
  %326 = vmatprep.subr.mxu0 0.0
  %327 = vmatpush2.msra.mxu0 0.0
  %328 = vmatprep.subr.mxu0 0.0
  %329 = vmatpush2.msra.mxu0 0.0
  %330 = vmatprep.subr.mxu0 0.0
  %331 = vmatpush2.msra.mxu0 0.0
  %332 = vmatprep.mubr.f32.mxu0 0.0
  %333 = vmatmul.mubr.f32.gmra.mxu0 %v260
  %v334 = vpop.f32.mrf.mxu0
  %v335 = vadd.f32 %v258, %v334
  %v336 = vpop.f32.mrf.mxu0
  %337 = vmatprep.mubr.f32.mxu0 0.0
  %338 = vmatmul.mubr.f32.gmra.mxu0 %v263
  %v339 = vpop.f32.mrf.mxu0
  %v340 = vadd.f32 %v258, %v339
  %v341 = vpop.f32.mrf.mxu0
  %342 = vdwg.mxu0
  %v343 = vxor.u32 %v335, 2147483648
  %v344 = vxor.u32 %v340, 2147483648
  %v345 = vmul.f32 %v343, 1.442695
  %v346 = vpow.pop %v345
  %v347 = vmul.f32 %v344, 1.442695
  %v348 = vpow.pop %v347
  %v349 = vadd.f32 %v346, 1.0
  %v350 = vadd.f32 %v348, 1.0
  %v351 = vrcp.pop %v349
  %v352 = vmul.f32 1.0, %v351
  %v353 = vrcp.pop %v350
  %v354 = vmul.f32 1.0, %v353
  %v355 = vmul.f32 %v335, %v352
  %v356 = vmul.f32 %v340, %v354
  %v357 = vsel %vm117, %v335, %v355
  %v358 = vsel %vm117, %v340, %v356
  %v359 = vlaneseq
  %v360 = vshrl.u32 %v359, 7
  %v361 = vsub.s32 0, %v360
  %v362 = vrot.slane %v254, %v361
  %vm363 = vcmask 48128
  %v365 = vsel %vm363, %v357, 0
  %v368 = vsel %vm363, %v358, 0
  %vm370 = vcmask 1045504
  %v372 = vsel %vm370, %v253, 0
  %374 = vmatprep.subr.mxu0 0.0
  %375 = vmatpush1.msra.mxu0 0.0
  %376 = vmatprep.subr.mxu0 0.0
  %377 = vmatpush1.msra.mxu0 0.0
  %378 = vmatprep.subr.mxu0 0.0
  %379 = vmatpush1.msra.mxu0 0.0
  %380 = vmatprep.subr.mxu0 0.0
  %381 = vmatpush1.msra.mxu0 0.0
  %382 = vmatprep.subr.mxu0 0.0
  %383 = vmatpush1.msra.mxu0 0.0
  %384 = vmatprep.subr.mxu0 0.0
  %385 = vmatpush1.msra.mxu0 0.0
  %386 = vmatprep.subr.mxu0 0.0
  %387 = vmatpush1.msra.mxu0 0.0
  %388 = vmatprep.subr.mxu0 0.0
  %389 = vmatpush1.msra.mxu0 0.0
  %390 = vmatprep.subr.mxu0 0.0
  %391 = vmatpush1.msra.mxu0 0.0
  %392 = vmatprep.subr.mxu0 0.0
  %393 = vmatpush1.msra.mxu0 0.0
  %394 = vmatprep.subr.mxu0 0.0
  %395 = vmatpush1.msra.mxu0 0.0
  %396 = vmatprep.subr.mxu0 0.0
  %397 = vmatpush1.msra.mxu0 0.0
  %398 = vmatprep.subr.mxu0 0.0
  %399 = vmatpush1.msra.mxu0 0.0
  %400 = vmatprep.subr.mxu0 0.0
  %401 = vmatpush1.msra.mxu0 0.0
  %402 = vmatprep.subr.mxu0 0.0
  %403 = vmatpush1.msra.mxu0 0.0
  %404 = vmatprep.subr.mxu0 0.0
  %405 = vmatpush1.msra.mxu0 %v372
  %406 = vmatprep.subr.mxu0 0.0
  %407 = vmatpush2.msra.mxu0 0.0
  %408 = vmatprep.subr.mxu0 0.0
  %409 = vmatpush2.msra.mxu0 0.0
  %410 = vmatprep.subr.mxu0 0.0
  %411 = vmatpush2.msra.mxu0 0.0
  %412 = vmatprep.subr.mxu0 0.0
  %413 = vmatpush2.msra.mxu0 0.0
  %414 = vmatprep.subr.mxu0 0.0
  %415 = vmatpush2.msra.mxu0 0.0
  %416 = vmatprep.subr.mxu0 0.0
  %417 = vmatpush2.msra.mxu0 0.0
  %418 = vmatprep.subr.mxu0 0.0
  %419 = vmatpush2.msra.mxu0 0.0
  %420 = vmatprep.subr.mxu0 0.0
  %421 = vmatpush2.msra.mxu0 0.0
  %422 = vmatprep.subr.mxu0 0.0
  %423 = vmatpush2.msra.mxu0 0.0
  %424 = vmatprep.subr.mxu0 0.0
  %425 = vmatpush2.msra.mxu0 0.0
  %426 = vmatprep.subr.mxu0 0.0
  %427 = vmatpush2.msra.mxu0 0.0
  %428 = vmatprep.subr.mxu0 0.0
  %429 = vmatpush2.msra.mxu0 0.0
  %430 = vmatprep.subr.mxu0 0.0
  %431 = vmatpush2.msra.mxu0 0.0
  %432 = vmatprep.subr.mxu0 0.0
  %433 = vmatpush2.msra.mxu0 0.0
  %434 = vmatprep.subr.mxu0 0.0
  %435 = vmatpush2.msra.mxu0 0.0
  %436 = vmatprep.subr.mxu0 0.0
  %437 = vmatpush2.msra.mxu0 0.0
  %438 = vmatprep.mubr.f32.mxu0 0.0
  %439 = vmatmul.mubr.f32.gmra.mxu0 %v365
  %v440 = vpop.f32.mrf.mxu0
  %v441 = vadd.f32 %v362, %v440
  %v442 = vpop.f32.mrf.mxu0
  %443 = vmatprep.mubr.f32.mxu0 0.0
  %444 = vmatmul.mubr.f32.gmra.mxu0 %v368
  %v445 = vpop.f32.mrf.mxu0
  %v446 = vadd.f32 %v362, %v445
  %v447 = vpop.f32.mrf.mxu0
  %448 = vdwg.mxu0
  %v449 = vsel %vm224, %v441, 0.0
  %v450 = vsel %vm224, %v446, 0.0
  %v451 = vadd.f32 %v449, %v450
  %v452 = vrot.slane %v451, 4
  %v453 = vadd.f32 %v451, %v452
  %v454 = vrot.slane %v453, 2
  %v455 = vadd.f32 %v453, %v454
  %v456 = vrot.slane %v455, 1
  %v457 = vadd.f32 %v455, %v456
  %v458 = vmul.f32 %v441, %v441
  %v459 = vmul.f32 %v446, %v446
  %v460 = vsel %vm224, %v458, 0.0
  %v461 = vsel %vm224, %v459, 0.0
  %v462 = vadd.f32 %v460, %v461
  %v463 = vrot.slane %v462, 4
  %v464 = vadd.f32 %v462, %v463
  %v465 = vrot.slane %v464, 2
  %v466 = vadd.f32 %v464, %v465
  %v467 = vrot.slane %v466, 1
  %v468 = vadd.f32 %v466, %v467
  %470 = vrot.lane.b32.xlu0 %v468, 4
  %v471 = vpop.permute.xlu0 %470
  %v473 = vsel %vm249, %v457, %v471
  %v474 = vld [vmem:[%s1 + $0x48] sm:$0xf]
  %v475 = vld [vmem:[%s1 + $0x64] sm:$0x1]
  %v476 = vld [vmem:[%s1 + $0x50] sm:$0x3f]
  %v477 = vld [vmem:[%s1 + $0x65] sm:$0x1]
  %v478 = vlaneseq
  %v479 = vshrl.u32 %v478, 7
  %v480 = vsub.s32 0, %v479
  %v481 = vrot.slane %v475, %v480
  %v483 = vsel %vm249, %v441, 0
  %v486 = vsel %vm249, %v446, 0
  %v489 = vsel %vm145, %v474, 0
  %491 = vmatprep.subr.mxu0 0.0
  %492 = vmatpush1.msra.mxu0 0.0
  %493 = vmatprep.subr.mxu0 0.0
  %494 = vmatpush1.msra.mxu0 0.0
  %495 = vmatprep.subr.mxu0 0.0
  %496 = vmatpush1.msra.mxu0 0.0
  %497 = vmatprep.subr.mxu0 0.0
  %498 = vmatpush1.msra.mxu0 0.0
  %499 = vmatprep.subr.mxu0 0.0
  %500 = vmatpush1.msra.mxu0 0.0
  %501 = vmatprep.subr.mxu0 0.0
  %502 = vmatpush1.msra.mxu0 0.0
  %503 = vmatprep.subr.mxu0 0.0
  %504 = vmatpush1.msra.mxu0 0.0
  %505 = vmatprep.subr.mxu0 0.0
  %506 = vmatpush1.msra.mxu0 0.0
  %507 = vmatprep.subr.mxu0 0.0
  %508 = vmatpush1.msra.mxu0 0.0
  %509 = vmatprep.subr.mxu0 0.0
  %510 = vmatpush1.msra.mxu0 0.0
  %511 = vmatprep.subr.mxu0 0.0
  %512 = vmatpush1.msra.mxu0 0.0
  %513 = vmatprep.subr.mxu0 0.0
  %514 = vmatpush1.msra.mxu0 0.0
  %515 = vmatprep.subr.mxu0 0.0
  %516 = vmatpush1.msra.mxu0 0.0
  %517 = vmatprep.subr.mxu0 0.0
  %518 = vmatpush1.msra.mxu0 0.0
  %519 = vmatprep.subr.mxu0 0.0
  %520 = vmatpush1.msra.mxu0 0.0
  %521 = vmatprep.subr.mxu0 0.0
  %522 = vmatpush1.msra.mxu0 %v489
  %523 = vmatprep.subr.mxu0 0.0
  %524 = vmatpush2.msra.mxu0 0.0
  %525 = vmatprep.subr.mxu0 0.0
  %526 = vmatpush2.msra.mxu0 0.0
  %527 = vmatprep.subr.mxu0 0.0
  %528 = vmatpush2.msra.mxu0 0.0
  %529 = vmatprep.subr.mxu0 0.0
  %530 = vmatpush2.msra.mxu0 0.0
  %531 = vmatprep.subr.mxu0 0.0
  %532 = vmatpush2.msra.mxu0 0.0
  %533 = vmatprep.subr.mxu0 0.0
  %534 = vmatpush2.msra.mxu0 0.0
  %535 = vmatprep.subr.mxu0 0.0
  %536 = vmatpush2.msra.mxu0 0.0
  %537 = vmatprep.subr.mxu0 0.0
  %538 = vmatpush2.msra.mxu0 0.0
  %539 = vmatprep.subr.mxu0 0.0
  %540 = vmatpush2.msra.mxu0 0.0
  %541 = vmatprep.subr.mxu0 0.0
  %542 = vmatpush2.msra.mxu0 0.0
  %543 = vmatprep.subr.mxu0 0.0
  %544 = vmatpush2.msra.mxu0 0.0
  %545 = vmatprep.subr.mxu0 0.0
  %546 = vmatpush2.msra.mxu0 0.0
  %547 = vmatprep.subr.mxu0 0.0
  %548 = vmatpush2.msra.mxu0 0.0
  %549 = vmatprep.subr.mxu0 0.0
  %550 = vmatpush2.msra.mxu0 0.0
  %551 = vmatprep.subr.mxu0 0.0
  %552 = vmatpush2.msra.mxu0 0.0
  %553 = vmatprep.subr.mxu0 0.0
  %554 = vmatpush2.msra.mxu0 0.0
  %555 = vmatprep.mubr.f32.mxu0 0.0
  %556 = vmatmul.mubr.f32.gmra.mxu0 %v483
  %v557 = vpop.f32.mrf.mxu0
  %v558 = vadd.f32 %v481, %v557
  %v559 = vpop.f32.mrf.mxu0
  %560 = vmatprep.mubr.f32.mxu0 0.0
  %561 = vmatmul.mubr.f32.gmra.mxu0 %v486
  %v562 = vpop.f32.mrf.mxu0
  %v563 = vadd.f32 %v481, %v562
  %v564 = vpop.f32.mrf.mxu0
  %565 = vdwg.mxu0
  %v566 = vxor.u32 %v558, 2147483648
  %v567 = vxor.u32 %v563, 2147483648
  %v568 = vmul.f32 %v566, 1.442695
  %v569 = vpow.pop %v568
  %v570 = vmul.f32 %v567, 1.442695
  %v571 = vpow.pop %v570
  %v572 = vadd.f32 %v569, 1.0
  %v573 = vadd.f32 %v571, 1.0
  %v574 = vrcp.pop %v572
  %v575 = vmul.f32 1.0, %v574
  %v576 = vrcp.pop %v573
  %v577 = vmul.f32 1.0, %v576
  %v578 = vmul.f32 %v558, %v575
  %v579 = vmul.f32 %v563, %v577
  %v580 = vsel %vm117, %v558, %v578
  %v581 = vsel %vm117, %v563, %v579
  %v582 = vlaneseq
  %v583 = vshrl.u32 %v582, 7
  %v584 = vsub.s32 0, %v583
  %v585 = vrot.slane %v477, %v584
  %v587 = vsel %vm363, %v580, 0
  %v590 = vsel %vm363, %v581, 0
  %v593 = vsel %vm370, %v476, 0
  %595 = vmatprep.subr.mxu0 0.0
  %596 = vmatpush1.msra.mxu0 0.0
  %597 = vmatprep.subr.mxu0 0.0
  %598 = vmatpush1.msra.mxu0 0.0
  %599 = vmatprep.subr.mxu0 0.0
  %600 = vmatpush1.msra.mxu0 0.0
  %601 = vmatprep.subr.mxu0 0.0
  %602 = vmatpush1.msra.mxu0 0.0
  %603 = vmatprep.subr.mxu0 0.0
  %604 = vmatpush1.msra.mxu0 0.0
  %605 = vmatprep.subr.mxu0 0.0
  %606 = vmatpush1.msra.mxu0 0.0
  %607 = vmatprep.subr.mxu0 0.0
  %608 = vmatpush1.msra.mxu0 0.0
  %609 = vmatprep.subr.mxu0 0.0
  %610 = vmatpush1.msra.mxu0 0.0
  %611 = vmatprep.subr.mxu0 0.0
  %612 = vmatpush1.msra.mxu0 0.0
  %613 = vmatprep.subr.mxu0 0.0
  %614 = vmatpush1.msra.mxu0 0.0
  %615 = vmatprep.subr.mxu0 0.0
  %616 = vmatpush1.msra.mxu0 0.0
  %617 = vmatprep.subr.mxu0 0.0
  %618 = vmatpush1.msra.mxu0 0.0
  %619 = vmatprep.subr.mxu0 0.0
  %620 = vmatpush1.msra.mxu0 0.0
  %621 = vmatprep.subr.mxu0 0.0
  %622 = vmatpush1.msra.mxu0 0.0
  %623 = vmatprep.subr.mxu0 0.0
  %624 = vmatpush1.msra.mxu0 0.0
  %625 = vmatprep.subr.mxu0 0.0
  %626 = vmatpush1.msra.mxu0 %v593
  %627 = vmatprep.subr.mxu0 0.0
  %628 = vmatpush2.msra.mxu0 0.0
  %629 = vmatprep.subr.mxu0 0.0
  %630 = vmatpush2.msra.mxu0 0.0
  %631 = vmatprep.subr.mxu0 0.0
  %632 = vmatpush2.msra.mxu0 0.0
  %633 = vmatprep.subr.mxu0 0.0
  %634 = vmatpush2.msra.mxu0 0.0
  %635 = vmatprep.subr.mxu0 0.0
  %636 = vmatpush2.msra.mxu0 0.0
  %637 = vmatprep.subr.mxu0 0.0
  %638 = vmatpush2.msra.mxu0 0.0
  %639 = vmatprep.subr.mxu0 0.0
  %640 = vmatpush2.msra.mxu0 0.0
  %641 = vmatprep.subr.mxu0 0.0
  %642 = vmatpush2.msra.mxu0 0.0
  %643 = vmatprep.subr.mxu0 0.0
  %644 = vmatpush2.msra.mxu0 0.0
  %645 = vmatprep.subr.mxu0 0.0
  %646 = vmatpush2.msra.mxu0 0.0
  %647 = vmatprep.subr.mxu0 0.0
  %648 = vmatpush2.msra.mxu0 0.0
  %649 = vmatprep.subr.mxu0 0.0
  %650 = vmatpush2.msra.mxu0 0.0
  %651 = vmatprep.subr.mxu0 0.0
  %652 = vmatpush2.msra.mxu0 0.0
  %653 = vmatprep.subr.mxu0 0.0
  %654 = vmatpush2.msra.mxu0 0.0
  %655 = vmatprep.subr.mxu0 0.0
  %656 = vmatpush2.msra.mxu0 0.0
  %657 = vmatprep.subr.mxu0 0.0
  %658 = vmatpush2.msra.mxu0 0.0
  %659 = vmatprep.mubr.f32.mxu0 0.0
  %660 = vmatmul.mubr.f32.gmra.mxu0 %v587
  %v661 = vpop.f32.mrf.mxu0
  %v662 = vadd.f32 %v585, %v661
  %v663 = vpop.f32.mrf.mxu0
  %664 = vmatprep.mubr.f32.mxu0 0.0
  %665 = vmatmul.mubr.f32.gmra.mxu0 %v590
  %v666 = vpop.f32.mrf.mxu0
  %v667 = vadd.f32 %v585, %v666
  %v668 = vpop.f32.mrf.mxu0
  %669 = vdwg.mxu0
  %v670 = vsel %vm224, %v662, 0.0
  %v671 = vsel %vm224, %v667, 0.0
  %v672 = vadd.f32 %v670, %v671
  %v673 = vrot.slane %v672, 4
  %v674 = vadd.f32 %v672, %v673
  %v675 = vrot.slane %v674, 2
  %v676 = vadd.f32 %v674, %v675
  %v677 = vrot.slane %v676, 1
  %v678 = vadd.f32 %v676, %v677
  %v679 = vmul.f32 %v662, %v662
  %v680 = vmul.f32 %v667, %v667
  %v681 = vsel %vm224, %v679, 0.0
  %v682 = vsel %vm224, %v680, 0.0
  %v683 = vadd.f32 %v681, %v682
  %v684 = vrot.slane %v683, 4
  %v685 = vadd.f32 %v683, %v684
  %v686 = vrot.slane %v685, 2
  %v687 = vadd.f32 %v685, %v686
  %v688 = vrot.slane %v687, 1
  %v689 = vadd.f32 %v687, %v688
  %691 = vrot.lane.b32.xlu0 %v689, 4
  %v692 = vpop.permute.xlu0 %691
  %v694 = vsel %vm249, %v678, %v692
  %696 = vrot.lane.b32.xlu0 %v473, 16
  %v697 = vpop.permute.xlu0 %696
  %700 = vrot.lane.b32.xlu0 %v694, 32
  %v701 = vpop.permute.xlu0 %700
  %vm703 = vcmask 130048
  %v704 = vsel %vm703, %v250, %v697
  %v705 = vsel %vm33, %v704, %v701
  %v706 = vld [vmem:[#allocation2] sm:$0x1]
  %vm707 = vcmask 392192
  %v708 = vsel %vm707, %v705, 0.0
  %v709 = vadd.f32 %v706, %v708
  %710 = vst [vmem:[#allocation2] sm:$0x1] %v709
  %v711 = vld [vmem:[%s1 + $0x58] sm:$0xf]
  %v712 = vld [vmem:[%s1 + $0x66] sm:$0x1]
  %v713 = vlaneseq
  %v714 = vshrl.u32 %v713, 7
  %v715 = vsub.s32 0, %v714
  %v716 = vrot.slane %v712, %v715
  %v718 = vsel %vm249, %v662, 0
  %v721 = vsel %vm249, %v667, 0
  %v724 = vsel %vm145, %v711, 0
  %726 = vmatprep.subr.mxu0 0.0
  %727 = vmatpush1.msra.mxu0 0.0
  %728 = vmatprep.subr.mxu0 0.0
  %729 = vmatpush1.msra.mxu0 0.0
  %730 = vmatprep.subr.mxu0 0.0
  %731 = vmatpush1.msra.mxu0 0.0
  %732 = vmatprep.subr.mxu0 0.0
  %733 = vmatpush1.msra.mxu0 0.0
  %734 = vmatprep.subr.mxu0 0.0
  %735 = vmatpush1.msra.mxu0 0.0
  %736 = vmatprep.subr.mxu0 0.0
  %737 = vmatpush1.msra.mxu0 0.0
  %738 = vmatprep.subr.mxu0 0.0
  %739 = vmatpush1.msra.mxu0 0.0
  %740 = vmatprep.subr.mxu0 0.0
  %741 = vmatpush1.msra.mxu0 0.0
  %742 = vmatprep.subr.mxu0 0.0
  %743 = vmatpush1.msra.mxu0 0.0
  %744 = vmatprep.subr.mxu0 0.0
  %745 = vmatpush1.msra.mxu0 0.0
  %746 = vmatprep.subr.mxu0 0.0
  %747 = vmatpush1.msra.mxu0 0.0
  %748 = vmatprep.subr.mxu0 0.0
  %749 = vmatpush1.msra.mxu0 0.0
  %750 = vmatprep.subr.mxu0 0.0
  %751 = vmatpush1.msra.mxu0 0.0
  %752 = vmatprep.subr.mxu0 0.0
  %753 = vmatpush1.msra.mxu0 0.0
  %754 = vmatprep.subr.mxu0 0.0
  %755 = vmatpush1.msra.mxu0 0.0
  %756 = vmatprep.subr.mxu0 0.0
  %757 = vmatpush1.msra.mxu0 %v724
  %758 = vmatprep.subr.mxu0 0.0
  %759 = vmatpush2.msra.mxu0 0.0
  %760 = vmatprep.subr.mxu0 0.0
  %761 = vmatpush2.msra.mxu0 0.0
  %762 = vmatprep.subr.mxu0 0.0
  %763 = vmatpush2.msra.mxu0 0.0
  %764 = vmatprep.subr.mxu0 0.0
  %765 = vmatpush2.msra.mxu0 0.0
  %766 = vmatprep.subr.mxu0 0.0
  %767 = vmatpush2.msra.mxu0 0.0
  %768 = vmatprep.subr.mxu0 0.0
  %769 = vmatpush2.msra.mxu0 0.0
  %770 = vmatprep.subr.mxu0 0.0
  %771 = vmatpush2.msra.mxu0 0.0
  %772 = vmatprep.subr.mxu0 0.0
  %773 = vmatpush2.msra.mxu0 0.0
  %774 = vmatprep.subr.mxu0 0.0
  %775 = vmatpush2.msra.mxu0 0.0
  %776 = vmatprep.subr.mxu0 0.0
  %777 = vmatpush2.msra.mxu0 0.0
  %778 = vmatprep.subr.mxu0 0.0
  %779 = vmatpush2.msra.mxu0 0.0
  %780 = vmatprep.subr.mxu0 0.0
  %781 = vmatpush2.msra.mxu0 0.0
  %782 = vmatprep.subr.mxu0 0.0
  %783 = vmatpush2.msra.mxu0 0.0
  %784 = vmatprep.subr.mxu0 0.0
  %785 = vmatpush2.msra.mxu0 0.0
  %786 = vmatprep.subr.mxu0 0.0
  %787 = vmatpush2.msra.mxu0 0.0
  %788 = vmatprep.subr.mxu0 0.0
  %789 = vmatpush2.msra.mxu0 0.0
  %790 = vmatprep.mubr.f32.mxu0 0.0
  %791 = vmatmul.mubr.f32.gmra.mxu0 %v718
  %v792 = vpop.f32.mrf.mxu0
  %v793 = vadd.f32 %v716, %v792
  %v794 = vpop.f32.mrf.mxu0
  %795 = vmatprep.mubr.f32.mxu0 0.0
  %796 = vmatmul.mubr.f32.gmra.mxu0 %v721
  %v797 = vpop.f32.mrf.mxu0
  %v798 = vadd.f32 %v716, %v797
  %v799 = vpop.f32.mrf.mxu0
  %800 = vdwg.mxu0
  %801 = vst.msk [vmem:[%s2] sm:$0xff] %vm249, %v793
  %802 = vst.msk [vmem:[%s2 + $0x8] sm:$0xff] %vm249, %v798
  // Predicated region
  $region14: #{forward.1} parent=0 // pred_check
    %p803 = pneg %p13
  $region15: #{forward.1} parent=0 // pred_check_branch
    %805 = sbr.rel (%p803) target = $region17
  $region16: #{forward.1} parent=0 // pred_region
    %v806 = vld [vmem:[#allocation2] sm:$0x1]
    %807 = vst [vmem:[%s3] sm:$0x1] %v806
  $region17: #{forward.1} parent=0 // pred_fallthru
    _
  // Predicated region
  $region18: #{forward.1} parent=0 // pred_check
    _
  $region19: #{forward.1} parent=0 // pred_check_branch
    %809 = sbr.rel (0) target = $region21
  $region20: #{forward.1} parent=0 // pred_region
    _
  $region21: #{forward.1} parent=0 // pred_fallthru
    _
  // Predicated region
  $region22: #{forward.1} parent=0 // pred_check
    _
  $region23: #{forward.1} parent=0 // pred_check_branch
    %811 = sbr.rel (0) target = $region25
  $region24: #{forward.1} parent=0 // pred_region
    _
  $region25: #{forward.1} parent=0 // pred_fallthru
    _
  // Predicated region
  $region26: #{forward.1} parent=0 // pred_check
    _
  $region27: #{forward.1} parent=0 // pred_check_branch
    %813 = sbr.rel (0) target = $region29
  $region28: #{forward.1} parent=0 // pred_region
    _
  $region29: #{forward.1} parent=0 // pred_fallthru
    _
  // Predicated region
  $region30: #{forward.1} parent=0 // pred_check
    _
  $region31: #{forward.1} parent=0 // pred_check_branch
    %815 = sbr.rel (0) target = $region33
  $region32: #{forward.1} parent=0 // pred_region
    _
  $region33: #{forward.1} parent=0 // pred_fallthru
    _

</llo_original>
